<compile_context>
chip_gen: v7x
topology: tpu7x:2x2x1
jax: 0.10.0
libtpu: 0.0.40
codegen_flags: <defaults>
</compile_context>

<pallas_src>
import functools

import jax
import jax.numpy as jnp
from jax.experimental import pallas as pl
from jax.experimental.pallas import tpu as pltpu


def _mlp_kernel(num_blocks, nodes, keep_threshold, keep_scale,
                use_dropout, has_hidden, *refs):
    """refs = (x, w0, [w_hidden], bn, w_out_slab, [drop_bits], out)."""
    refs = list(refs)
    out_ref = refs.pop()

    idx = 0
    x_ref = refs[idx]; idx += 1
    w0_ref = refs[idx]; idx += 1
    wh_ref = None
    if has_hidden:
        wh_ref = refs[idx]; idx += 1
    bn_ref = refs[idx]; idx += 1      # (num_blocks, 2, nodes): [i,0]=gamma, [i,1]=beta
    wo_ref = refs[idx]; idx += 1      # (nodes+1, out_dim): rows 0..nodes-1 = W, row nodes = b
    bits_ref = None
    if use_dropout:
        bits_ref = refs[idx]; idx += 1  # (num_blocks, B, nodes) uint32

    h = x_ref[...]   # batch on sublanes, features on lanes

    for i in range(num_blocks):
        w = w0_ref[...] if i == 0 else wh_ref[i - 1]

        # Linear (MXU, f32 accumulate).  No bias: BN mean-subtraction cancels it.
        z = jnp.dot(h, w, preferred_element_type=jnp.float32)

        # BatchNorm1d training mode, biased variance.
        # Two independent sublane reductions, var = E[z^2] - mu^2; gamma folded
        # into the inverse std before broadcasting; rsqrt on the EUP.
        mu = jnp.mean(z, axis=0, keepdims=True)
        ms = jnp.mean(z * z, axis=0, keepdims=True)
        var = ms - mu * mu
        gb = bn_ref[i]                                   # (2, nodes)
        scale = gb[0:1, :] * jax.lax.rsqrt(var + 1e-5)   # gamma * inv_std
        y = (z - mu) * scale + gb[1:2, :]

        # ReLU
        y = jnp.maximum(y, 0.0)

        # Dropout(p): keep iff uint32 bits >= round(p * 2^32); rescale by 1/(1-p).
        if use_dropout:
            keep = bits_ref[i] >= jnp.uint32(keep_threshold)
            y = jnp.where(keep, y * jnp.float32(keep_scale), 0.0)

        h = y

    # Final Linear (nodes -> out_dim); weight and bias packed in one slab.
    wo = wo_ref[...]
    out_ref[...] = (jnp.dot(h, wo[0:nodes, :], preferred_element_type=jnp.float32)
                    + wo[nodes:nodes + 1, :])


def mlp_forward(x, params, *, dropout_rate=0.2, apply_dropout=True,
                rng_key=None, first_layer_bf16=False):
    """Fused forward for the whole MLPModel in a single gridless pallas_call."""
    batch = x.shape[0]
    blocks = params["blocks"]
    num_blocks = len(blocks)
    nodes = blocks[0]["w"].shape[1]
    out_dim = params["w_out"].shape[1]
    use_dropout = bool(apply_dropout) and float(dropout_rate) > 0.0

    # --- Coalesced parameter slabs (fewer inputs -> fewer DMA descriptors) ---
    w0 = blocks[0]["w"]
    if first_layer_bf16:
        # Halves the dominant HBM read (902x16 weight + activations); MXU still
        # accumulates in f32.  All BN math stays f32.
        x = x.astype(jnp.bfloat16)
        w0 = w0.astype(jnp.bfloat16)

    w_hidden = None
    if num_blocks > 1:
        w_hidden = jnp.stack([blk["w"] for blk in blocks[1:]], axis=0)

    bn = jnp.stack(
        [jnp.stack([blk["gamma"].reshape(-1), blk["beta"].reshape(-1)], axis=0)
         for blk in blocks], axis=0).astype(jnp.float32)            # (nb, 2, nodes)

    wo_slab = jnp.concatenate(
        [params["w_out"], params["b_out"].reshape(1, out_dim)], axis=0)  # (nodes+1, out)

    inputs = [x, w0]
    if w_hidden is not None:
        inputs.append(w_hidden)
    inputs += [bn, wo_slab]

    keep_threshold = 0
    keep_scale = 1.0
    if use_dropout:
        if rng_key is None:
            rng_key = jax.random.PRNGKey(0)
        bits = jax.random.bits(rng_key, (num_blocks, batch, nodes), dtype=jnp.uint32)
        inputs.append(bits)
        keep_threshold = min(int(round(float(dropout_rate) * 2.0 ** 32)), 2 ** 32 - 1)
        keep_scale = 1.0 / (1.0 - float(dropout_rate))

    kernel = functools.partial(
        _mlp_kernel, num_blocks, nodes, keep_threshold, keep_scale,
        use_dropout, w_hidden is not None)

    vmem = pl.BlockSpec(memory_space=pltpu.MemorySpace.VMEM)

    return pl.pallas_call(
        kernel,
        out_shape=jax.ShapeDtypeStruct((batch, out_dim), jnp.float32),
        in_specs=[vmem] * len(inputs),
        out_specs=vmem,
    )(*inputs)


def mlp_forward_ref(x, params):
    """Pure-JAX reference (PyTorch training-mode semantics, dropout disabled).

    Keeps the per-block Linear biases to demonstrate they are mathematically
    cancelled by BatchNorm's mean subtraction (the kernel omits them)."""
    hp = jax.lax.Precision.HIGHEST
    h = x
    for blk in params["blocks"]:
        z = jnp.dot(h, blk["w"], precision=hp) + blk["b"]
        mu = jnp.mean(z, axis=0, keepdims=True)
        var = jnp.mean((z - mu) ** 2, axis=0, keepdims=True)
        h = jnp.maximum((z - mu) / jnp.sqrt(var + 1e-5) * blk["gamma"] + blk["beta"], 0.0)
    return jnp.dot(h, params["w_out"], precision=hp) + params["b_out"]


def init_params(key, inputs, layers, nodes, out_dim):
    """Deterministic synthetic parameters mirroring the PyTorch module shapes."""
    dims = [inputs] + [nodes] * (layers - 1)
    keys = jax.random.split(key, 3 * layers)
    blocks = []
    for i in range(layers - 1):
        fan_in = dims[i]
        w = jax.random.normal(keys[3 * i], (fan_in, nodes), jnp.float32) / jnp.sqrt(
            jnp.float32(fan_in))
        b = 0.1 * jax.random.normal(keys[3 * i + 1], (1, nodes), jnp.float32)
        gamma = 1.0 + 0.1 * jax.random.normal(keys[3 * i + 2], (1, nodes), jnp.float32)
        beta = jnp.zeros((1, nodes), jnp.float32)
        blocks.append(dict(w=w, b=b, gamma=gamma, beta=beta))
    w_out = jax.random.normal(keys[-2], (nodes, out_dim), jnp.float32) / jnp.sqrt(
        jnp.float32(nodes))
    b_out = 0.1 * jax.random.normal(keys[-1], (1, out_dim), jnp.float32)
    return dict(blocks=blocks, w_out=w_out, b_out=b_out)


if __name__ == "__main__":
    # Module defaults: MLPModel(inputs=22*41, layers=4, nodes=16) -> out dim 5
    inputs = 22 * 41   # 902
    layers = 4
    nodes = 16
    out_dim = 5
    batch = 8

    key = jax.random.PRNGKey(0)
    k_x, k_p, k_d = jax.random.split(key, 3)

    x = jax.random.normal(k_x, (batch, inputs), jnp.float32)
    params = init_params(k_p, inputs, layers, nodes, out_dim)

    # 1) Correctness: dropout disabled, f32 first layer, vs pure-JAX reference
    #    (reference keeps the Linear biases; kernel drops them -> proves the
    #    BN-cancellation optimization is exact).
    y_nodrop = mlp_forward(x, params, dropout_rate=0.2, apply_dropout=False,
                           first_layer_bf16=False)
    y_ref = mlp_forward_ref(x, params)
    jax.block_until_ready((y_nodrop, y_ref))
    assert y_nodrop.shape == (batch, out_dim)
    assert jnp.allclose(y_nodrop, y_ref, rtol=1e-2, atol=1e-2), (
        float(jnp.max(jnp.abs(y_nodrop - y_ref))))

    # 2) bf16 first-layer matmul path (halved HBM read), dropout disabled.
    y_bf16 = mlp_forward(x, params, dropout_rate=0.2, apply_dropout=False,
                         first_layer_bf16=True)
    jax.block_until_ready(y_bf16)
    assert jnp.allclose(y_bf16, y_ref, rtol=1e-1, atol=1e-1), (
        float(jnp.max(jnp.abs(y_bf16 - y_ref))))

    # 3) Full training-mode forward (dropout via precomputed uint32 bits).
    y_train = mlp_forward(x, params, dropout_rate=0.2, apply_dropout=True,
                          rng_key=k_d, first_layer_bf16=True)
    jax.block_until_ready(y_train)
    assert y_train.shape == (batch, out_dim)
    assert bool(jnp.all(jnp.isfinite(y_train)))

    print("KERNEL_OK")
</pallas_src>

<mosaic_0001>
module attributes {stable_mosaic.version = 11 : i64} {
  func.func @_mlp_kernel(%arg0: memref<8x902xf32, #tpu.memory_space<vmem>>, %arg1: memref<902x16xf32, #tpu.memory_space<vmem>>, %arg2: memref<2x16x16xf32, #tpu.memory_space<vmem>>, %arg3: memref<3x2x16xf32, #tpu.memory_space<vmem>>, %arg4: memref<17x5xf32, #tpu.memory_space<vmem>>, %arg5: memref<8x5xf32, #tpu.memory_space<vmem>>) attributes {dimension_semantics = [], scalar_prefetch = 0 : i64, scratch_operands = 0 : i64, tpu.core_type = #tpu.core_type<tc>} {
    %c0 = arith.constant 0 : index
    %c0_0 = arith.constant 0 : index
    %0 = vector.load %arg0[%c0, %c0_0] : memref<8x902xf32, #tpu.memory_space<vmem>>, vector<8x902xf32>
    %c0_1 = arith.constant 0 : index
    %c0_2 = arith.constant 0 : index
    %1 = vector.load %arg1[%c0_1, %c0_2] : memref<902x16xf32, #tpu.memory_space<vmem>>, vector<902x16xf32>
    %cst = arith.constant dense<0.000000e+00> : vector<8x16xf32>
    %2 = tpu.matmul %0, %1, %cst {dimension_numbers = #tpu.dot_dimension_numbers<[1], [0], [0], [1], [0, 0, 1, 1], [], []>} : vector<8x902xf32>, vector<902x16xf32>, vector<8x16xf32> -> vector<8x16xf32>
    %cst_3 = arith.constant dense<0.000000e+00> : vector<16xf32>
    %3 = vector.multi_reduction <add>, %2, %cst_3 [0] : vector<8x16xf32> to vector<16xf32>
    %4 = vector.shape_cast %3 : vector<16xf32> to vector<1x16xf32>
    %cst_4 = arith.constant 8.000000e+00 : f32
    %5 = vector.broadcast %cst_4 : f32 to vector<1x16xf32>
    %6 = arith.divf %4, %5 : vector<1x16xf32>
    %7 = arith.mulf %2, %2 : vector<8x16xf32>
    %cst_5 = arith.constant dense<0.000000e+00> : vector<16xf32>
    %8 = vector.multi_reduction <add>, %7, %cst_5 [0] : vector<8x16xf32> to vector<16xf32>
    %9 = vector.shape_cast %8 : vector<16xf32> to vector<1x16xf32>
    %cst_6 = arith.constant 8.000000e+00 : f32
    %10 = vector.broadcast %cst_6 : f32 to vector<1x16xf32>
    %11 = arith.divf %9, %10 : vector<1x16xf32>
    %12 = arith.mulf %6, %6 : vector<1x16xf32>
    %13 = arith.subf %11, %12 : vector<1x16xf32>
    %c0_7 = arith.constant 0 : index
    %c0_8 = arith.constant 0 : index
    %c0_9 = arith.constant 0 : index
    %14 = vector.load %arg3[%c0_7, %c0_8, %c0_9] : memref<3x2x16xf32, #tpu.memory_space<vmem>>, vector<1x2x16xf32>
    %15 = vector.shape_cast %14 : vector<1x2x16xf32> to vector<2x16xf32>
    %16 = vector.extract_strided_slice %15 {offsets = [0, 0], sizes = [1, 16], strides = [1, 1]} : vector<2x16xf32> to vector<1x16xf32>
    %cst_10 = arith.constant 9.99999974E-6 : f32
    %17 = vector.broadcast %cst_10 : f32 to vector<1x16xf32>
    %18 = arith.addf %13, %17 : vector<1x16xf32>
    %19 = math.rsqrt %18 : vector<1x16xf32>
    %20 = arith.mulf %16, %19 : vector<1x16xf32>
    %21 = vector.broadcast %6 : vector<1x16xf32> to vector<8x16xf32>
    %22 = arith.subf %2, %21 : vector<8x16xf32>
    %23 = vector.broadcast %20 : vector<1x16xf32> to vector<8x16xf32>
    %24 = arith.mulf %22, %23 : vector<8x16xf32>
    %25 = vector.extract_strided_slice %15 {offsets = [1, 0], sizes = [1, 16], strides = [1, 1]} : vector<2x16xf32> to vector<1x16xf32>
    %26 = vector.broadcast %25 : vector<1x16xf32> to vector<8x16xf32>
    %27 = arith.addf %24, %26 : vector<8x16xf32>
    %cst_11 = arith.constant 0.000000e+00 : f32
    %28 = vector.broadcast %cst_11 : f32 to vector<8x16xf32>
    %29 = arith.maximumf %27, %28 : vector<8x16xf32>
    %c0_12 = arith.constant 0 : index
    %c0_13 = arith.constant 0 : index
    %c0_14 = arith.constant 0 : index
    %30 = vector.load %arg2[%c0_12, %c0_13, %c0_14] : memref<2x16x16xf32, #tpu.memory_space<vmem>>, vector<1x16x16xf32>
    %31 = vector.shape_cast %30 : vector<1x16x16xf32> to vector<16x16xf32>
    %cst_15 = arith.constant dense<0.000000e+00> : vector<8x16xf32>
    %32 = tpu.matmul %29, %31, %cst_15 {dimension_numbers = #tpu.dot_dimension_numbers<[1], [0], [0], [1], [0, 0, 1, 1], [], []>} : vector<8x16xf32>, vector<16x16xf32>, vector<8x16xf32> -> vector<8x16xf32>
    %cst_16 = arith.constant dense<0.000000e+00> : vector<16xf32>
    %33 = vector.multi_reduction <add>, %32, %cst_16 [0] : vector<8x16xf32> to vector<16xf32>
    %34 = vector.shape_cast %33 : vector<16xf32> to vector<1x16xf32>
    %cst_17 = arith.constant 8.000000e+00 : f32
    %35 = vector.broadcast %cst_17 : f32 to vector<1x16xf32>
    %36 = arith.divf %34, %35 : vector<1x16xf32>
    %37 = arith.mulf %32, %32 : vector<8x16xf32>
    %cst_18 = arith.constant dense<0.000000e+00> : vector<16xf32>
    %38 = vector.multi_reduction <add>, %37, %cst_18 [0] : vector<8x16xf32> to vector<16xf32>
    %39 = vector.shape_cast %38 : vector<16xf32> to vector<1x16xf32>
    %cst_19 = arith.constant 8.000000e+00 : f32
    %40 = vector.broadcast %cst_19 : f32 to vector<1x16xf32>
    %41 = arith.divf %39, %40 : vector<1x16xf32>
    %42 = arith.mulf %36, %36 : vector<1x16xf32>
    %43 = arith.subf %41, %42 : vector<1x16xf32>
    %c1 = arith.constant 1 : index
    %c0_20 = arith.constant 0 : index
    %c0_21 = arith.constant 0 : index
    %44 = vector.load %arg3[%c1, %c0_20, %c0_21] : memref<3x2x16xf32, #tpu.memory_space<vmem>>, vector<1x2x16xf32>
    %45 = vector.shape_cast %44 : vector<1x2x16xf32> to vector<2x16xf32>
    %46 = vector.extract_strided_slice %45 {offsets = [0, 0], sizes = [1, 16], strides = [1, 1]} : vector<2x16xf32> to vector<1x16xf32>
    %cst_22 = arith.constant 9.99999974E-6 : f32
    %47 = vector.broadcast %cst_22 : f32 to vector<1x16xf32>
    %48 = arith.addf %43, %47 : vector<1x16xf32>
    %49 = math.rsqrt %48 : vector<1x16xf32>
    %50 = arith.mulf %46, %49 : vector<1x16xf32>
    %51 = vector.broadcast %36 : vector<1x16xf32> to vector<8x16xf32>
    %52 = arith.subf %32, %51 : vector<8x16xf32>
    %53 = vector.broadcast %50 : vector<1x16xf32> to vector<8x16xf32>
    %54 = arith.mulf %52, %53 : vector<8x16xf32>
    %55 = vector.extract_strided_slice %45 {offsets = [1, 0], sizes = [1, 16], strides = [1, 1]} : vector<2x16xf32> to vector<1x16xf32>
    %56 = vector.broadcast %55 : vector<1x16xf32> to vector<8x16xf32>
    %57 = arith.addf %54, %56 : vector<8x16xf32>
    %cst_23 = arith.constant 0.000000e+00 : f32
    %58 = vector.broadcast %cst_23 : f32 to vector<8x16xf32>
    %59 = arith.maximumf %57, %58 : vector<8x16xf32>
    %c1_24 = arith.constant 1 : index
    %c0_25 = arith.constant 0 : index
    %c0_26 = arith.constant 0 : index
    %60 = vector.load %arg2[%c1_24, %c0_25, %c0_26] : memref<2x16x16xf32, #tpu.memory_space<vmem>>, vector<1x16x16xf32>
    %61 = vector.shape_cast %60 : vector<1x16x16xf32> to vector<16x16xf32>
    %cst_27 = arith.constant dense<0.000000e+00> : vector<8x16xf32>
    %62 = tpu.matmul %59, %61, %cst_27 {dimension_numbers = #tpu.dot_dimension_numbers<[1], [0], [0], [1], [0, 0, 1, 1], [], []>} : vector<8x16xf32>, vector<16x16xf32>, vector<8x16xf32> -> vector<8x16xf32>
    %cst_28 = arith.constant dense<0.000000e+00> : vector<16xf32>
    %63 = vector.multi_reduction <add>, %62, %cst_28 [0] : vector<8x16xf32> to vector<16xf32>
    %64 = vector.shape_cast %63 : vector<16xf32> to vector<1x16xf32>
    %cst_29 = arith.constant 8.000000e+00 : f32
    %65 = vector.broadcast %cst_29 : f32 to vector<1x16xf32>
    %66 = arith.divf %64, %65 : vector<1x16xf32>
    %67 = arith.mulf %62, %62 : vector<8x16xf32>
    %cst_30 = arith.constant dense<0.000000e+00> : vector<16xf32>
    %68 = vector.multi_reduction <add>, %67, %cst_30 [0] : vector<8x16xf32> to vector<16xf32>
    %69 = vector.shape_cast %68 : vector<16xf32> to vector<1x16xf32>
    %cst_31 = arith.constant 8.000000e+00 : f32
    %70 = vector.broadcast %cst_31 : f32 to vector<1x16xf32>
    %71 = arith.divf %69, %70 : vector<1x16xf32>
    %72 = arith.mulf %66, %66 : vector<1x16xf32>
    %73 = arith.subf %71, %72 : vector<1x16xf32>
    %c2 = arith.constant 2 : index
    %c0_32 = arith.constant 0 : index
    %c0_33 = arith.constant 0 : index
    %74 = vector.load %arg3[%c2, %c0_32, %c0_33] : memref<3x2x16xf32, #tpu.memory_space<vmem>>, vector<1x2x16xf32>
    %75 = vector.shape_cast %74 : vector<1x2x16xf32> to vector<2x16xf32>
    %76 = vector.extract_strided_slice %75 {offsets = [0, 0], sizes = [1, 16], strides = [1, 1]} : vector<2x16xf32> to vector<1x16xf32>
    %cst_34 = arith.constant 9.99999974E-6 : f32
    %77 = vector.broadcast %cst_34 : f32 to vector<1x16xf32>
    %78 = arith.addf %73, %77 : vector<1x16xf32>
    %79 = math.rsqrt %78 : vector<1x16xf32>
    %80 = arith.mulf %76, %79 : vector<1x16xf32>
    %81 = vector.broadcast %66 : vector<1x16xf32> to vector<8x16xf32>
    %82 = arith.subf %62, %81 : vector<8x16xf32>
    %83 = vector.broadcast %80 : vector<1x16xf32> to vector<8x16xf32>
    %84 = arith.mulf %82, %83 : vector<8x16xf32>
    %85 = vector.extract_strided_slice %75 {offsets = [1, 0], sizes = [1, 16], strides = [1, 1]} : vector<2x16xf32> to vector<1x16xf32>
    %86 = vector.broadcast %85 : vector<1x16xf32> to vector<8x16xf32>
    %87 = arith.addf %84, %86 : vector<8x16xf32>
    %cst_35 = arith.constant 0.000000e+00 : f32
    %88 = vector.broadcast %cst_35 : f32 to vector<8x16xf32>
    %89 = arith.maximumf %87, %88 : vector<8x16xf32>
    %c0_36 = arith.constant 0 : index
    %c0_37 = arith.constant 0 : index
    %90 = vector.load %arg4[%c0_36, %c0_37] : memref<17x5xf32, #tpu.memory_space<vmem>>, vector<17x5xf32>
    %91 = vector.extract_strided_slice %90 {offsets = [0, 0], sizes = [16, 5], strides = [1, 1]} : vector<17x5xf32> to vector<16x5xf32>
    %cst_38 = arith.constant dense<0.000000e+00> : vector<8x5xf32>
    %92 = tpu.matmul %89, %91, %cst_38 {dimension_numbers = #tpu.dot_dimension_numbers<[1], [0], [0], [1], [0, 0, 1, 1], [], []>} : vector<8x16xf32>, vector<16x5xf32>, vector<8x5xf32> -> vector<8x5xf32>
    %93 = vector.extract_strided_slice %90 {offsets = [16, 0], sizes = [1, 5], strides = [1, 1]} : vector<17x5xf32> to vector<1x5xf32>
    %94 = vector.broadcast %93 : vector<1x5xf32> to vector<8x5xf32>
    %95 = arith.addf %92, %94 : vector<8x5xf32>
    %c0_39 = arith.constant 0 : index
    %c0_40 = arith.constant 0 : index
    %96 = vector.load %arg5[%c0_39, %c0_40] : memref<8x5xf32, #tpu.memory_space<vmem>>, vector<8x5xf32>
    tpu.vector_store %arg5[%c0_39, %c0_40], %95 {strides = array<i32>} : memref<8x5xf32, #tpu.memory_space<vmem>>, vector<8x5xf32>,
    return
  }
}

</mosaic_0001>

<llo_original>
// kernel: tpu_custom_call.1
$region0: #{tpu_custom_call.1}
  #allocation0 [shape = 'u32[]', space=smem, size = 0x4, offset = 0x4, fixed_abs, tag = 'smem constant byte address 0x4 - core index']
  #allocation1 [shape = 'u32[144,128]{1,0:T(1,128)}', space=vmem, size = 0x12000, scoped, tag = 'internal scratch']
  %s0 = inlined_call_operand.vmem [shape: f32[8,902], index: 0, kind: input, shape index: {}]
  %s1 = inlined_call_operand.vmem [shape: f32[902,16], index: 1, kind: input, shape index: {}]
  %s2 = inlined_call_operand.vmem [shape: f32[2,16,16], index: 2, kind: input, shape index: {}]
  %s3 = inlined_call_operand.vmem [shape: f32[3,2,16], index: 3, kind: input, shape index: {}]
  %s4 = inlined_call_operand.vmem [shape: f32[17,5], index: 4, kind: input, shape index: {}]
  %s5 = inlined_call_operand.hbm [shape: f32[8,5], index: 5, kind: output, shape index: {}]
  %s6 = sld [smem:[#allocation0]]
  $region30: #{tpu_custom_call.1} parent=0
    _
  %s8 = ssub.s32 1, %s6
  %s9 = scalar_select 0, %s8, %s6
  $region1: #{tpu_custom_call.1} parent=0
    #allocation2 [shape = 'u8[4096]{0}', space=vmem, size = 0x1000, scoped, tag = 'output window, operand 0, single buffered']
    #allocation3 [shape = 's32[1]{0}', space=sflag, size = 0x4, scoped, tag = 'scoped memory for tpu_custom_call.1']
    %10 = vsyncpa [#allocation3], 0
    // Predicated region
    $region2: #{tpu_custom_call.1} parent=1 // pred_check
      _
    $region3: #{tpu_custom_call.1} parent=1 // pred_check_branch
      %12 = sbr.rel (0) target = $region5
    $region4: #{tpu_custom_call.1} parent=1 // pred_region
      _
    $region5: #{tpu_custom_call.1} parent=1 // pred_fallthru
      _
    // Predicated region
    $region6: #{tpu_custom_call.1} parent=1 // pred_check
      _
    $region7: #{tpu_custom_call.1} parent=1 // pred_check_branch
      %14 = sbr.rel (0) target = $region9
    $region8: #{tpu_custom_call.1} parent=1 // pred_region
      _
    $region9: #{tpu_custom_call.1} parent=1 // pred_fallthru
      _
    // Predicated region
    $region10: #{tpu_custom_call.1} parent=1 // pred_check
      _
    $region11: #{tpu_custom_call.1} parent=1 // pred_check_branch
      %16 = sbr.rel (0) target = $region13
    $region12: #{tpu_custom_call.1} parent=1 // pred_region
      _
    $region13: #{tpu_custom_call.1} parent=1 // pred_fallthru
      _
    // Predicated region
    $region14: #{tpu_custom_call.1} parent=1 // pred_check
      _
    $region15: #{tpu_custom_call.1} parent=1 // pred_check_branch
      %18 = sbr.rel (0) target = $region17
    $region16: #{tpu_custom_call.1} parent=1 // pred_region
      _
    $region17: #{tpu_custom_call.1} parent=1 // pred_fallthru
      _
    // Predicated region
    $region18: #{tpu_custom_call.1} parent=1 // pred_check
      _
    $region19: #{tpu_custom_call.1} parent=1 // pred_check_branch
      %20 = sbr.rel (0) target = $region21
    $region20: #{tpu_custom_call.1} parent=1 // pred_region
      _
    $region21: #{tpu_custom_call.1} parent=1 // pred_fallthru
      _
    %v21 = vld [vmem:[%s0] sm:$0xff]
    %v22 = vld [vmem:[%s0 + $0x8] sm:$0xff]
    %v23 = vld [vmem:[%s0 + $0x10] sm:$0xff]
    %v24 = vld [vmem:[%s0 + $0x18] sm:$0xff]
    %v25 = vld [vmem:[%s0 + $0x20] sm:$0xff]
    %v26 = vld [vmem:[%s0 + $0x28] sm:$0xff]
    %v27 = vld [vmem:[%s0 + $0x30] sm:$0xff]
    %v28 = vld [vmem:[%s0 + $0x38] sm:$0xff]
    %v29 = vld [vmem:[%s1] sm:$0xff]
    %v30 = vld [vmem:[%s1 + $0x8] sm:$0xff]
    %v31 = vld [vmem:[%s1 + $0x10] sm:$0xff]
    %v32 = vld [vmem:[%s1 + $0x18] sm:$0xff]
    %v33 = vld [vmem:[%s1 + $0x20] sm:$0xff]
    %v34 = vld [vmem:[%s1 + $0x28] sm:$0xff]
    %v35 = vld [vmem:[%s1 + $0x30] sm:$0xff]
    %v36 = vld [vmem:[%s1 + $0x38] sm:$0xff]
    %v37 = vld [vmem:[%s1 + $0x40] sm:$0xff]
    %v38 = vld [vmem:[%s1 + $0x48] sm:$0xff]
    %v39 = vld [vmem:[%s1 + $0x50] sm:$0xff]
    %v40 = vld [vmem:[%s1 + $0x58] sm:$0xff]
    %v41 = vld [vmem:[%s1 + $0x60] sm:$0xff]
    %v42 = vld [vmem:[%s1 + $0x68] sm:$0xff]
    %v43 = vld [vmem:[%s1 + $0x70] sm:$0xff]
    %v44 = vld [vmem:[%s1 + $0x78] sm:$0xff]
    %v45 = vld [vmem:[%s1 + $0x80] sm:$0xff]
    %v46 = vld [vmem:[%s1 + $0x88] sm:$0xff]
    %v47 = vld [vmem:[%s1 + $0x90] sm:$0xff]
    %v48 = vld [vmem:[%s1 + $0x98] sm:$0xff]
    %v49 = vld [vmem:[%s1 + $0xa0] sm:$0xff]
    %v50 = vld [vmem:[%s1 + $0xa8] sm:$0xff]
    %v51 = vld [vmem:[%s1 + $0xb0] sm:$0xff]
    %v52 = vld [vmem:[%s1 + $0xb8] sm:$0xff]
    %v53 = vld [vmem:[%s1 + $0xc0] sm:$0xff]
    %v54 = vld [vmem:[%s1 + $0xc8] sm:$0xff]
    %v55 = vld [vmem:[%s1 + $0xd0] sm:$0xff]
    %v56 = vld [vmem:[%s1 + $0xd8] sm:$0xff]
    %v57 = vld [vmem:[%s1 + $0xe0] sm:$0xff]
    %v58 = vld [vmem:[%s1 + $0xe8] sm:$0xff]
    %v59 = vld [vmem:[%s1 + $0xf0] sm:$0xff]
    %v60 = vld [vmem:[%s1 + $0xf8] sm:$0xff]
    %v61 = vld [vmem:[%s1 + $0x100] sm:$0xff]
    %v62 = vld [vmem:[%s1 + $0x108] sm:$0xff]
    %v63 = vld [vmem:[%s1 + $0x110] sm:$0xff]
    %v64 = vld [vmem:[%s1 + $0x118] sm:$0xff]
    %v65 = vld [vmem:[%s1 + $0x120] sm:$0xff]
    %v66 = vld [vmem:[%s1 + $0x128] sm:$0xff]
    %v67 = vld [vmem:[%s1 + $0x130] sm:$0xff]
    %v68 = vld [vmem:[%s1 + $0x138] sm:$0xff]
    %v69 = vld [vmem:[%s1 + $0x140] sm:$0xff]
    %v70 = vld [vmem:[%s1 + $0x148] sm:$0xff]
    %v71 = vld [vmem:[%s1 + $0x150] sm:$0xff]
    %v72 = vld [vmem:[%s1 + $0x158] sm:$0xff]
    %v73 = vld [vmem:[%s1 + $0x160] sm:$0xff]
    %v74 = vld [vmem:[%s1 + $0x168] sm:$0xff]
    %v75 = vld [vmem:[%s1 + $0x170] sm:$0xff]
    %v76 = vld [vmem:[%s1 + $0x178] sm:$0xff]
    %v77 = vld [vmem:[%s1 + $0x180] sm:$0xff]
    %v78 = vld [vmem:[%s1 + $0x188] sm:$0xff]
    %v79 = vld [vmem:[%s1 + $0x190] sm:$0xff]
    %v80 = vld [vmem:[%s1 + $0x198] sm:$0xff]
    %v81 = vld [vmem:[%s1 + $0x1a0] sm:$0xff]
    %v82 = vld [vmem:[%s1 + $0x1a8] sm:$0xff]
    %v83 = vld [vmem:[%s1 + $0x1b0] sm:$0xff]
    %v84 = vld [vmem:[%s1 + $0x1b8] sm:$0xff]
    %v85 = vld [vmem:[%s1 + $0x1c0] sm:$0xff]
    %v86 = vld [vmem:[%s1 + $0x1c8] sm:$0xff]
    %v87 = vld [vmem:[%s1 + $0x1d0] sm:$0xff]
    %v88 = vld [vmem:[%s1 + $0x1d8] sm:$0xff]
    %v89 = vld [vmem:[%s1 + $0x1e0] sm:$0xff]
    %v90 = vld [vmem:[%s1 + $0x1e8] sm:$0xff]
    %v91 = vld [vmem:[%s1 + $0x1f0] sm:$0xff]
    %v92 = vld [vmem:[%s1 + $0x1f8] sm:$0xff]
    %v93 = vld [vmem:[%s1 + $0x200] sm:$0xff]
    %v94 = vld [vmem:[%s1 + $0x208] sm:$0xff]
    %v95 = vld [vmem:[%s1 + $0x210] sm:$0xff]
    %v96 = vld [vmem:[%s1 + $0x218] sm:$0xff]
    %v97 = vld [vmem:[%s1 + $0x220] sm:$0xff]
    %v98 = vld [vmem:[%s1 + $0x228] sm:$0xff]
    %v99 = vld [vmem:[%s1 + $0x230] sm:$0xff]
    %v100 = vld [vmem:[%s1 + $0x238] sm:$0xff]
    %v101 = vld [vmem:[%s1 + $0x240] sm:$0xff]
    %v102 = vld [vmem:[%s1 + $0x248] sm:$0xff]
    %v103 = vld [vmem:[%s1 + $0x250] sm:$0xff]
    %v104 = vld [vmem:[%s1 + $0x258] sm:$0xff]
    %v105 = vld [vmem:[%s1 + $0x260] sm:$0xff]
    %v106 = vld [vmem:[%s1 + $0x268] sm:$0xff]
    %v107 = vld [vmem:[%s1 + $0x270] sm:$0xff]
    %v108 = vld [vmem:[%s1 + $0x278] sm:$0xff]
    %v109 = vld [vmem:[%s1 + $0x280] sm:$0xff]
    %v110 = vld [vmem:[%s1 + $0x288] sm:$0xff]
    %v111 = vld [vmem:[%s1 + $0x290] sm:$0xff]
    %v112 = vld [vmem:[%s1 + $0x298] sm:$0xff]
    %v113 = vld [vmem:[%s1 + $0x2a0] sm:$0xff]
    %v114 = vld [vmem:[%s1 + $0x2a8] sm:$0xff]
    %v115 = vld [vmem:[%s1 + $0x2b0] sm:$0xff]
    %v116 = vld [vmem:[%s1 + $0x2b8] sm:$0xff]
    %v117 = vld [vmem:[%s1 + $0x2c0] sm:$0xff]
    %v118 = vld [vmem:[%s1 + $0x2c8] sm:$0xff]
    %v119 = vld [vmem:[%s1 + $0x2d0] sm:$0xff]
    %v120 = vld [vmem:[%s1 + $0x2d8] sm:$0xff]
    %v121 = vld [vmem:[%s1 + $0x2e0] sm:$0xff]
    %v122 = vld [vmem:[%s1 + $0x2e8] sm:$0xff]
    %v123 = vld [vmem:[%s1 + $0x2f0] sm:$0xff]
    %v124 = vld [vmem:[%s1 + $0x2f8] sm:$0xff]
    %v125 = vld [vmem:[%s1 + $0x300] sm:$0xff]
    %v126 = vld [vmem:[%s1 + $0x308] sm:$0xff]
    %v127 = vld [vmem:[%s1 + $0x310] sm:$0xff]
    %v128 = vld [vmem:[%s1 + $0x318] sm:$0xff]
    %v129 = vld [vmem:[%s1 + $0x320] sm:$0xff]
    %v130 = vld [vmem:[%s1 + $0x328] sm:$0xff]
    %v131 = vld [vmem:[%s1 + $0x330] sm:$0xff]
    %v132 = vld [vmem:[%s1 + $0x338] sm:$0xff]
    %v133 = vld [vmem:[%s1 + $0x340] sm:$0xff]
    %v134 = vld [vmem:[%s1 + $0x348] sm:$0xff]
    %v135 = vld [vmem:[%s1 + $0x350] sm:$0xff]
    %v136 = vld [vmem:[%s1 + $0x358] sm:$0xff]
    %v137 = vld [vmem:[%s1 + $0x360] sm:$0xff]
    %v138 = vld [vmem:[%s1 + $0x368] sm:$0xff]
    %v139 = vld [vmem:[%s1 + $0x370] sm:$0xff]
    %v140 = vld [vmem:[%s1 + $0x378] sm:$0xff]
    %v141 = vld [vmem:[%s1 + $0x380] sm:$0x3f]
    %vm142 = vcmask 48128
    %v144 = vsel %vm142, %v28, 0
    %vm146 = vcmask 1045504
    %v148 = vsel %vm146, %v141, 0
    %150 = vmatprep.subr.mxu0 0.0
    %151 = vmatpush1.msra.mxu0 %v29
    %152 = vmatprep.subr.mxu0 0.0
    %153 = vmatpush1.msra.mxu0 %v30
    %154 = vmatprep.subr.mxu0 0.0
    %155 = vmatpush1.msra.mxu0 %v31
    %156 = vmatprep.subr.mxu0 0.0
    %157 = vmatpush1.msra.mxu0 %v32
    %158 = vmatprep.subr.mxu0 0.0
    %159 = vmatpush1.msra.mxu0 %v33
    %160 = vmatprep.subr.mxu0 0.0
    %161 = vmatpush1.msra.mxu0 %v34
    %162 = vmatprep.subr.mxu0 0.0
    %163 = vmatpush1.msra.mxu0 %v35
    %164 = vmatprep.subr.mxu0 0.0
    %165 = vmatpush1.msra.mxu0 %v36
    %166 = vmatprep.subr.mxu0 0.0
    %167 = vmatpush1.msra.mxu0 %v37
    %168 = vmatprep.subr.mxu0 0.0
    %169 = vmatpush1.msra.mxu0 %v38
    %170 = vmatprep.subr.mxu0 0.0
    %171 = vmatpush1.msra.mxu0 %v39
    %172 = vmatprep.subr.mxu0 0.0
    %173 = vmatpush1.msra.mxu0 %v40
    %174 = vmatprep.subr.mxu0 0.0
    %175 = vmatpush1.msra.mxu0 %v41
    %176 = vmatprep.subr.mxu0 0.0
    %177 = vmatpush1.msra.mxu0 %v42
    %178 = vmatprep.subr.mxu0 0.0
    %179 = vmatpush1.msra.mxu0 %v43
    %180 = vmatprep.subr.mxu0 0.0
    %181 = vmatpush1.msra.mxu0 %v44
    %182 = vmatprep.subr.mxu0 0.0
    %183 = vmatpush1.msra.mxu0 %v45
    %184 = vmatprep.subr.mxu0 0.0
    %185 = vmatpush1.msra.mxu0 %v46
    %186 = vmatprep.subr.mxu0 0.0
    %187 = vmatpush1.msra.mxu0 %v47
    %188 = vmatprep.subr.mxu0 0.0
    %189 = vmatpush1.msra.mxu0 %v48
    %190 = vmatprep.subr.mxu0 0.0
    %191 = vmatpush1.msra.mxu0 %v49
    %192 = vmatprep.subr.mxu0 0.0
    %193 = vmatpush1.msra.mxu0 %v50
    %194 = vmatprep.subr.mxu0 0.0
    %195 = vmatpush1.msra.mxu0 %v51
    %196 = vmatprep.subr.mxu0 0.0
    %197 = vmatpush1.msra.mxu0 %v52
    %198 = vmatprep.subr.mxu0 0.0
    %199 = vmatpush1.msra.mxu0 %v53
    %200 = vmatprep.subr.mxu0 0.0
    %201 = vmatpush1.msra.mxu0 %v54
    %202 = vmatprep.subr.mxu0 0.0
    %203 = vmatpush1.msra.mxu0 %v55
    %204 = vmatprep.subr.mxu0 0.0
    %205 = vmatpush1.msra.mxu0 %v56
    %206 = vmatprep.subr.mxu0 0.0
    %207 = vmatpush1.msra.mxu0 %v57
    %208 = vmatprep.subr.mxu0 0.0
    %209 = vmatpush1.msra.mxu0 %v58
    %210 = vmatprep.subr.mxu0 0.0
    %211 = vmatpush1.msra.mxu0 %v59
    %212 = vmatprep.subr.mxu0 0.0
    %213 = vmatpush1.msra.mxu0 %v60
    %214 = vmatprep.mubr.f32.mxu0 %v22
    %215 = vmatmul.mubr.f32.gmra.mrb[0].mxu0 %v21
    %v216 = vpop.f32.mrb[0].mxu0
    %v217 = vadd.f32 0.0, %v216
    %v218 = vpop.f32.mrb[0].mxu0
    %219 = vdwg.mxu0
    %220 = vmatprep.subr.mxu0 0.0
    %221 = vmatpush1.msra.mxu0 %v61
    %222 = vmatprep.subr.mxu0 0.0
    %223 = vmatpush1.msra.mxu0 %v62
    %224 = vmatprep.subr.mxu0 0.0
    %225 = vmatpush1.msra.mxu0 %v63
    %226 = vmatprep.subr.mxu0 0.0
    %227 = vmatpush1.msra.mxu0 %v64
    %228 = vmatprep.subr.mxu0 0.0
    %229 = vmatpush1.msra.mxu0 %v65
    %230 = vmatprep.subr.mxu0 0.0
    %231 = vmatpush1.msra.mxu0 %v66
    %232 = vmatprep.subr.mxu0 0.0
    %233 = vmatpush1.msra.mxu0 %v67
    %234 = vmatprep.subr.mxu0 0.0
    %235 = vmatpush1.msra.mxu0 %v68
    %236 = vmatprep.subr.mxu0 0.0
    %237 = vmatpush1.msra.mxu0 %v69
    %238 = vmatprep.subr.mxu0 0.0
    %239 = vmatpush1.msra.mxu0 %v70
    %240 = vmatprep.subr.mxu0 0.0
    %241 = vmatpush1.msra.mxu0 %v71
    %242 = vmatprep.subr.mxu0 0.0
    %243 = vmatpush1.msra.mxu0 %v72
    %244 = vmatprep.subr.mxu0 0.0
    %245 = vmatpush1.msra.mxu0 %v73
    %246 = vmatprep.subr.mxu0 0.0
    %247 = vmatpush1.msra.mxu0 %v74
    %248 = vmatprep.subr.mxu0 0.0
    %249 = vmatpush1.msra.mxu0 %v75
    %250 = vmatprep.subr.mxu0 0.0
    %251 = vmatpush1.msra.mxu0 %v76
    %252 = vmatprep.subr.mxu0 0.0
    %253 = vmatpush1.msra.mxu0 %v77
    %254 = vmatprep.subr.mxu0 0.0
    %255 = vmatpush1.msra.mxu0 %v78
    %256 = vmatprep.subr.mxu0 0.0
    %257 = vmatpush1.msra.mxu0 %v79
    %258 = vmatprep.subr.mxu0 0.0
    %259 = vmatpush1.msra.mxu0 %v80
    %260 = vmatprep.subr.mxu0 0.0
    %261 = vmatpush1.msra.mxu0 %v81
    %262 = vmatprep.subr.mxu0 0.0
    %263 = vmatpush1.msra.mxu0 %v82
    %264 = vmatprep.subr.mxu0 0.0
    %265 = vmatpush1.msra.mxu0 %v83
    %266 = vmatprep.subr.mxu0 0.0
    %267 = vmatpush1.msra.mxu0 %v84
    %268 = vmatprep.subr.mxu0 0.0
    %269 = vmatpush1.msra.mxu0 %v85
    %270 = vmatprep.subr.mxu0 0.0
    %271 = vmatpush1.msra.mxu0 %v86
    %272 = vmatprep.subr.mxu0 0.0
    %273 = vmatpush1.msra.mxu0 %v87
    %274 = vmatprep.subr.mxu0 0.0
    %275 = vmatpush1.msra.mxu0 %v88
    %276 = vmatprep.subr.mxu0 0.0
    %277 = vmatpush1.msra.mxu0 %v89
    %278 = vmatprep.subr.mxu0 0.0
    %279 = vmatpush1.msra.mxu0 %v90
    %280 = vmatprep.subr.mxu0 0.0
    %281 = vmatpush1.msra.mxu0 %v91
    %282 = vmatprep.subr.mxu0 0.0
    %283 = vmatpush1.msra.mxu0 %v92
    %284 = vmatprep.mubr.f32.mxu0 %v24
    %285 = vmatmul.mubr.f32.gmra.mrb[0].mxu0 %v23
    %v286 = vpop.f32.mrb[0].mxu0
    %v287 = vadd.f32 %v217, %v286
    %v288 = vpop.f32.mrb[0].mxu0
    %289 = vdwg.mxu0
    %290 = vmatprep.subr.mxu0 0.0
    %291 = vmatpush1.msra.mxu0 %v93
    %292 = vmatprep.subr.mxu0 0.0
    %293 = vmatpush1.msra.mxu0 %v94
    %294 = vmatprep.subr.mxu0 0.0
    %295 = vmatpush1.msra.mxu0 %v95
    %296 = vmatprep.subr.mxu0 0.0
    %297 = vmatpush1.msra.mxu0 %v96
    %298 = vmatprep.subr.mxu0 0.0
    %299 = vmatpush1.msra.mxu0 %v97
    %300 = vmatprep.subr.mxu0 0.0
    %301 = vmatpush1.msra.mxu0 %v98
    %302 = vmatprep.subr.mxu0 0.0
    %303 = vmatpush1.msra.mxu0 %v99
    %304 = vmatprep.subr.mxu0 0.0
    %305 = vmatpush1.msra.mxu0 %v100
    %306 = vmatprep.subr.mxu0 0.0
    %307 = vmatpush1.msra.mxu0 %v101
    %308 = vmatprep.subr.mxu0 0.0
    %309 = vmatpush1.msra.mxu0 %v102
    %310 = vmatprep.subr.mxu0 0.0
    %311 = vmatpush1.msra.mxu0 %v103
    %312 = vmatprep.subr.mxu0 0.0
    %313 = vmatpush1.msra.mxu0 %v104
    %314 = vmatprep.subr.mxu0 0.0
    %315 = vmatpush1.msra.mxu0 %v105
    %316 = vmatprep.subr.mxu0 0.0
    %317 = vmatpush1.msra.mxu0 %v106
    %318 = vmatprep.subr.mxu0 0.0
    %319 = vmatpush1.msra.mxu0 %v107
    %320 = vmatprep.subr.mxu0 0.0
    %321 = vmatpush1.msra.mxu0 %v108
    %322 = vmatprep.subr.mxu0 0.0
    %323 = vmatpush1.msra.mxu0 %v109
    %324 = vmatprep.subr.mxu0 0.0
    %325 = vmatpush1.msra.mxu0 %v110
    %326 = vmatprep.subr.mxu0 0.0
    %327 = vmatpush1.msra.mxu0 %v111
    %328 = vmatprep.subr.mxu0 0.0
    %329 = vmatpush1.msra.mxu0 %v112
    %330 = vmatprep.subr.mxu0 0.0
    %331 = vmatpush1.msra.mxu0 %v113
    %332 = vmatprep.subr.mxu0 0.0
    %333 = vmatpush1.msra.mxu0 %v114
    %334 = vmatprep.subr.mxu0 0.0
    %335 = vmatpush1.msra.mxu0 %v115
    %336 = vmatprep.subr.mxu0 0.0
    %337 = vmatpush1.msra.mxu0 %v116
    %338 = vmatprep.subr.mxu0 0.0
    %339 = vmatpush1.msra.mxu0 %v117
    %340 = vmatprep.subr.mxu0 0.0
    %341 = vmatpush1.msra.mxu0 %v118
    %342 = vmatprep.subr.mxu0 0.0
    %343 = vmatpush1.msra.mxu0 %v119
    %344 = vmatprep.subr.mxu0 0.0
    %345 = vmatpush1.msra.mxu0 %v120
    %346 = vmatprep.subr.mxu0 0.0
    %347 = vmatpush1.msra.mxu0 %v121
    %348 = vmatprep.subr.mxu0 0.0
    %349 = vmatpush1.msra.mxu0 %v122
    %350 = vmatprep.subr.mxu0 0.0
    %351 = vmatpush1.msra.mxu0 %v123
    %352 = vmatprep.subr.mxu0 0.0
    %353 = vmatpush1.msra.mxu0 %v124
    %354 = vmatprep.mubr.f32.mxu0 %v26
    %355 = vmatmul.mubr.f32.gmra.mrb[0].mxu0 %v25
    %v356 = vpop.f32.mrb[0].mxu0
    %v357 = vadd.f32 %v287, %v356
    %v358 = vpop.f32.mrb[0].mxu0
    %359 = vdwg.mxu0
    %360 = vmatprep.subr.mxu0 0.0
    %361 = vmatpush1.msra.mxu0 %v125
    %362 = vmatprep.subr.mxu0 0.0
    %363 = vmatpush1.msra.mxu0 %v126
    %364 = vmatprep.subr.mxu0 0.0
    %365 = vmatpush1.msra.mxu0 %v127
    %366 = vmatprep.subr.mxu0 0.0
    %367 = vmatpush1.msra.mxu0 %v128
    %368 = vmatprep.subr.mxu0 0.0
    %369 = vmatpush1.msra.mxu0 %v129
    %370 = vmatprep.subr.mxu0 0.0
    %371 = vmatpush1.msra.mxu0 %v130
    %372 = vmatprep.subr.mxu0 0.0
    %373 = vmatpush1.msra.mxu0 %v131
    %374 = vmatprep.subr.mxu0 0.0
    %375 = vmatpush1.msra.mxu0 %v132
    %376 = vmatprep.subr.mxu0 0.0
    %377 = vmatpush1.msra.mxu0 %v133
    %378 = vmatprep.subr.mxu0 0.0
    %379 = vmatpush1.msra.mxu0 %v134
    %380 = vmatprep.subr.mxu0 0.0
    %381 = vmatpush1.msra.mxu0 %v135
    %382 = vmatprep.subr.mxu0 0.0
    %383 = vmatpush1.msra.mxu0 %v136
    %384 = vmatprep.subr.mxu0 0.0
    %385 = vmatpush1.msra.mxu0 %v137
    %386 = vmatprep.subr.mxu0 0.0
    %387 = vmatpush1.msra.mxu0 %v138
    %388 = vmatprep.subr.mxu0 0.0
    %389 = vmatpush1.msra.mxu0 %v139
    %390 = vmatprep.subr.mxu0 0.0
    %391 = vmatpush1.msra.mxu0 %v140
    %392 = vmatprep.subr.mxu0 0.0
    %393 = vmatpush1.msra.mxu0 %v148
    %394 = vmatprep.subr.mxu0 0.0
    %395 = vmatpush1.msra.mxu0 0.0
    %396 = vmatprep.subr.mxu0 0.0
    %397 = vmatpush1.msra.mxu0 0.0
    %398 = vmatprep.subr.mxu0 0.0
    %399 = vmatpush1.msra.mxu0 0.0
    %400 = vmatprep.subr.mxu0 0.0
    %401 = vmatpush1.msra.mxu0 0.0
    %402 = vmatprep.subr.mxu0 0.0
    %403 = vmatpush1.msra.mxu0 0.0
    %404 = vmatprep.subr.mxu0 0.0
    %405 = vmatpush1.msra.mxu0 0.0
    %406 = vmatprep.subr.mxu0 0.0
    %407 = vmatpush1.msra.mxu0 0.0
    %408 = vmatprep.subr.mxu0 0.0
    %409 = vmatpush1.msra.mxu0 0.0
    %410 = vmatprep.subr.mxu0 0.0
    %411 = vmatpush1.msra.mxu0 0.0
    %412 = vmatprep.subr.mxu0 0.0
    %413 = vmatpush1.msra.mxu0 0.0
    %414 = vmatprep.subr.mxu0 0.0
    %415 = vmatpush1.msra.mxu0 0.0
    %416 = vmatprep.subr.mxu0 0.0
    %417 = vmatpush1.msra.mxu0 0.0
    %418 = vmatprep.subr.mxu0 0.0
    %419 = vmatpush1.msra.mxu0 0.0
    %420 = vmatprep.subr.mxu0 0.0
    %421 = vmatpush1.msra.mxu0 0.0
    %422 = vmatprep.subr.mxu0 0.0
    %423 = vmatpush1.msra.mxu0 0.0
    %424 = vmatprep.mubr.f32.mxu0 %v144
    %425 = vmatmul.mubr.f32.gmra.mrb[0].mxu0 %v27
    %v426 = vpop.f32.mrb[0].mxu0
    %v427 = vadd.f32 %v357, %v426
    %v428 = vpop.f32.mrb[0].mxu0
    %429 = vdwg.mxu0
    %vm430 = vcmask 130048
    %v431 = vsel %vm430, %v427, 0.0
    %v432 = vrot.slane %v431, 4
    %v433 = vadd.f32 %v431, %v432
    %v434 = vrot.slane %v433, 2
    %v435 = vadd.f32 %v433, %v434
    %v436 = vrot.slane %v435, 1
    %v437 = vadd.f32 %v435, %v436
    %v438 = vrcp.pop 8.0
    %v439 = vmul.f32 %v437, %v438
    %v440 = vmul.f32 %v427, %v427
    %v441 = vsel %vm430, %v440, 0.0
    %v442 = vrot.slane %v441, 4
    %v443 = vadd.f32 %v441, %v442
    %v444 = vrot.slane %v443, 2
    %v445 = vadd.f32 %v443, %v444
    %v446 = vrot.slane %v445, 1
    %v447 = vadd.f32 %v445, %v446
    %v448 = vmul.f32 %v447, %v438
    %v449 = vmul.f32 %v439, %v439
    %v450 = vsub.f32 %v448, %v449
    %v451 = vld [vmem:[%s3] sm:$0x3]
    %v452 = vadd.f32 %v450, 1e-05
    %v453 = vrsqrt.pop %v452
    %v454 = vmul.f32 %v451, %v453
    %v455 = vsub.f32 %v427, %v439
    %v456 = vlaneseq
    %v457 = vshrl.u32 %v456, 7
    %v458 = vsub.s32 0, %v457
    %v459 = vrot.slane %v454, %v458
    %v460 = vmul.f32 %v455, %v459
    %v461 = vlaneseq
    %v462 = vshrl.u32 %v461, 7
    %v463 = vsub.s32 1, %v462
    %v464 = vrot.slane %v451, %v463
    %v465 = vadd.f32 %v460, %v464
    %v466 = vmax.f32 %v465, 0.0
    %v467 = vld [vmem:[%s2] sm:$0xff]
    %v468 = vld [vmem:[%s2 + $0x8] sm:$0xff]
    %v470 = vsel %vm430, %v466, 0
    %472 = vmatprep.subr.mxu0 0.0
    %473 = vmatpush1.msra.mxu0 %v467
    %474 = vmatprep.subr.mxu0 0.0
    %475 = vmatpush1.msra.mxu0 %v468
    %476 = vmatprep.subr.mxu0 0.0
    %477 = vmatpush1.msra.mxu0 0.0
    %478 = vmatprep.subr.mxu0 0.0
    %479 = vmatpush1.msra.mxu0 0.0
    %480 = vmatprep.subr.mxu0 0.0
    %481 = vmatpush1.msra.mxu0 0.0
    %482 = vmatprep.subr.mxu0 0.0
    %483 = vmatpush1.msra.mxu0 0.0
    %484 = vmatprep.subr.mxu0 0.0
    %485 = vmatpush1.msra.mxu0 0.0
    %486 = vmatprep.subr.mxu0 0.0
    %487 = vmatpush1.msra.mxu0 0.0
    %488 = vmatprep.subr.mxu0 0.0
    %489 = vmatpush1.msra.mxu0 0.0
    %490 = vmatprep.subr.mxu0 0.0
    %491 = vmatpush1.msra.mxu0 0.0
    %492 = vmatprep.subr.mxu0 0.0
    %493 = vmatpush1.msra.mxu0 0.0
    %494 = vmatprep.subr.mxu0 0.0
    %495 = vmatpush1.msra.mxu0 0.0
    %496 = vmatprep.subr.mxu0 0.0
    %497 = vmatpush1.msra.mxu0 0.0
    %498 = vmatprep.subr.mxu0 0.0
    %499 = vmatpush1.msra.mxu0 0.0
    %500 = vmatprep.subr.mxu0 0.0
    %501 = vmatpush1.msra.mxu0 0.0
    %502 = vmatprep.subr.mxu0 0.0
    %503 = vmatpush1.msra.mxu0 0.0
    %504 = vmatprep.subr.mxu0 0.0
    %505 = vmatpush1.msra.mxu0 0.0
    %506 = vmatprep.subr.mxu0 0.0
    %507 = vmatpush1.msra.mxu0 0.0
    %508 = vmatprep.subr.mxu0 0.0
    %509 = vmatpush1.msra.mxu0 0.0
    %510 = vmatprep.subr.mxu0 0.0
    %511 = vmatpush1.msra.mxu0 0.0
    %512 = vmatprep.subr.mxu0 0.0
    %513 = vmatpush1.msra.mxu0 0.0
    %514 = vmatprep.subr.mxu0 0.0
    %515 = vmatpush1.msra.mxu0 0.0
    %516 = vmatprep.subr.mxu0 0.0
    %517 = vmatpush1.msra.mxu0 0.0
    %518 = vmatprep.subr.mxu0 0.0
    %519 = vmatpush1.msra.mxu0 0.0
    %520 = vmatprep.subr.mxu0 0.0
    %521 = vmatpush1.msra.mxu0 0.0
    %522 = vmatprep.subr.mxu0 0.0
    %523 = vmatpush1.msra.mxu0 0.0
    %524 = vmatprep.subr.mxu0 0.0
    %525 = vmatpush1.msra.mxu0 0.0
    %526 = vmatprep.subr.mxu0 0.0
    %527 = vmatpush1.msra.mxu0 0.0
    %528 = vmatprep.subr.mxu0 0.0
    %529 = vmatpush1.msra.mxu0 0.0
    %530 = vmatprep.subr.mxu0 0.0
    %531 = vmatpush1.msra.mxu0 0.0
    %532 = vmatprep.subr.mxu0 0.0
    %533 = vmatpush1.msra.mxu0 0.0
    %534 = vmatprep.subr.mxu0 0.0
    %535 = vmatpush1.msra.mxu0 0.0
    %536 = vmatprep.mubr.f32.mxu0 0.0
    %537 = vmatmul.mubr.f32.gmra.mrb[0].mxu0 %v470
    %v538 = vpop.f32.mrb[0].mxu0
    %v539 = vadd.f32 0.0, %v538
    %v540 = vpop.f32.mrb[0].mxu0
    %541 = vdwg.mxu0
    %v542 = vsel %vm430, %v539, 0.0
    %v543 = vrot.slane %v542, 4
    %v544 = vadd.f32 %v542, %v543
    %v545 = vrot.slane %v544, 2
    %v546 = vadd.f32 %v544, %v545
    %v547 = vrot.slane %v546, 1
    %v548 = vadd.f32 %v546, %v547
    %v549 = vmul.f32 %v548, %v438
    %v550 = vmul.f32 %v539, %v539
    %v551 = vsel %vm430, %v550, 0.0
    %v552 = vrot.slane %v551, 4
    %v553 = vadd.f32 %v551, %v552
    %v554 = vrot.slane %v553, 2
    %v555 = vadd.f32 %v553, %v554
    %v556 = vrot.slane %v555, 1
    %v557 = vadd.f32 %v555, %v556
    %v558 = vmul.f32 %v557, %v438
    %v559 = vmul.f32 %v549, %v549
    %v560 = vsub.f32 %v558, %v559
    %s561 = scalar_lea.vmem %s3, 2
    %v562 = vld [vmem:[%s561] sm:$0x3]
    %v563 = vadd.f32 %v560, 1e-05
    %v564 = vrsqrt.pop %v563
    %v565 = vmul.f32 %v562, %v564
    %v566 = vsub.f32 %v539, %v549
    %v567 = vlaneseq
    %v568 = vshrl.u32 %v567, 7
    %v569 = vsub.s32 0, %v568
    %v570 = vrot.slane %v565, %v569
    %v571 = vmul.f32 %v566, %v570
    %v572 = vlaneseq
    %v573 = vshrl.u32 %v572, 7
    %v574 = vsub.s32 1, %v573
    %v575 = vrot.slane %v562, %v574
    %v576 = vadd.f32 %v571, %v575
    %v577 = vmax.f32 %v576, 0.0
    %s578 = scalar_lea.vmem %s2, 16
    %v579 = vld [vmem:[%s578] sm:$0xff]
    %v580 = vld [vmem:[%s578 + $0x8] sm:$0xff]
    %v582 = vsel %vm430, %v577, 0
    %584 = vmatprep.subr.mxu0 0.0
    %585 = vmatpush1.msra.mxu0 %v579
    %586 = vmatprep.subr.mxu0 0.0
    %587 = vmatpush1.msra.mxu0 %v580
    %588 = vmatprep.subr.mxu0 0.0
    %589 = vmatpush1.msra.mxu0 0.0
    %590 = vmatprep.subr.mxu0 0.0
    %591 = vmatpush1.msra.mxu0 0.0
    %592 = vmatprep.subr.mxu0 0.0
    %593 = vmatpush1.msra.mxu0 0.0
    %594 = vmatprep.subr.mxu0 0.0
    %595 = vmatpush1.msra.mxu0 0.0
    %596 = vmatprep.subr.mxu0 0.0
    %597 = vmatpush1.msra.mxu0 0.0
    %598 = vmatprep.subr.mxu0 0.0
    %599 = vmatpush1.msra.mxu0 0.0
    %600 = vmatprep.subr.mxu0 0.0
    %601 = vmatpush1.msra.mxu0 0.0
    %602 = vmatprep.subr.mxu0 0.0
    %603 = vmatpush1.msra.mxu0 0.0
    %604 = vmatprep.subr.mxu0 0.0
    %605 = vmatpush1.msra.mxu0 0.0
    %606 = vmatprep.subr.mxu0 0.0
    %607 = vmatpush1.msra.mxu0 0.0
    %608 = vmatprep.subr.mxu0 0.0
    %609 = vmatpush1.msra.mxu0 0.0
    %610 = vmatprep.subr.mxu0 0.0
    %611 = vmatpush1.msra.mxu0 0.0
    %612 = vmatprep.subr.mxu0 0.0
    %613 = vmatpush1.msra.mxu0 0.0
    %614 = vmatprep.subr.mxu0 0.0
    %615 = vmatpush1.msra.mxu0 0.0
    %616 = vmatprep.subr.mxu0 0.0
    %617 = vmatpush1.msra.mxu0 0.0
    %618 = vmatprep.subr.mxu0 0.0
    %619 = vmatpush1.msra.mxu0 0.0
    %620 = vmatprep.subr.mxu0 0.0
    %621 = vmatpush1.msra.mxu0 0.0
    %622 = vmatprep.subr.mxu0 0.0
    %623 = vmatpush1.msra.mxu0 0.0
    %624 = vmatprep.subr.mxu0 0.0
    %625 = vmatpush1.msra.mxu0 0.0
    %626 = vmatprep.subr.mxu0 0.0
    %627 = vmatpush1.msra.mxu0 0.0
    %628 = vmatprep.subr.mxu0 0.0
    %629 = vmatpush1.msra.mxu0 0.0
    %630 = vmatprep.subr.mxu0 0.0
    %631 = vmatpush1.msra.mxu0 0.0
    %632 = vmatprep.subr.mxu0 0.0
    %633 = vmatpush1.msra.mxu0 0.0
    %634 = vmatprep.subr.mxu0 0.0
    %635 = vmatpush1.msra.mxu0 0.0
    %636 = vmatprep.subr.mxu0 0.0
    %637 = vmatpush1.msra.mxu0 0.0
    %638 = vmatprep.subr.mxu0 0.0
    %639 = vmatpush1.msra.mxu0 0.0
    %640 = vmatprep.subr.mxu0 0.0
    %641 = vmatpush1.msra.mxu0 0.0
    %642 = vmatprep.subr.mxu0 0.0
    %643 = vmatpush1.msra.mxu0 0.0
    %644 = vmatprep.subr.mxu0 0.0
    %645 = vmatpush1.msra.mxu0 0.0
    %646 = vmatprep.subr.mxu0 0.0
    %647 = vmatpush1.msra.mxu0 0.0
    %648 = vmatprep.mubr.f32.mxu0 0.0
    %649 = vmatmul.mubr.f32.gmra.mrb[0].mxu0 %v582
    %v650 = vpop.f32.mrb[0].mxu0
    %v651 = vadd.f32 0.0, %v650
    %v652 = vpop.f32.mrb[0].mxu0
    %653 = vdwg.mxu0
    %v654 = vsel %vm430, %v651, 0.0
    %v655 = vrot.slane %v654, 4
    %v656 = vadd.f32 %v654, %v655
    %v657 = vrot.slane %v656, 2
    %v658 = vadd.f32 %v656, %v657
    %v659 = vrot.slane %v658, 1
    %v660 = vadd.f32 %v658, %v659
    %v661 = vmul.f32 %v660, %v438
    %v662 = vmul.f32 %v651, %v651
    %v663 = vsel %vm430, %v662, 0.0
    %v664 = vrot.slane %v663, 4
    %v665 = vadd.f32 %v663, %v664
    %v666 = vrot.slane %v665, 2
    %v667 = vadd.f32 %v665, %v666
    %v668 = vrot.slane %v667, 1
    %v669 = vadd.f32 %v667, %v668
    %v670 = vmul.f32 %v669, %v438
    %v671 = vmul.f32 %v661, %v661
    %v672 = vsub.f32 %v670, %v671
    %s673 = scalar_lea.vmem %s3, 4
    %v674 = vld [vmem:[%s673] sm:$0x3]
    %v675 = vadd.f32 %v672, 1e-05
    %v676 = vrsqrt.pop %v675
    %v677 = vmul.f32 %v674, %v676
    %v678 = vsub.f32 %v651, %v661
    %v679 = vlaneseq
    %v680 = vshrl.u32 %v679, 7
    %v681 = vsub.s32 0, %v680
    %v682 = vrot.slane %v677, %v681
    %v683 = vmul.f32 %v678, %v682
    %v684 = vlaneseq
    %v685 = vshrl.u32 %v684, 7
    %v686 = vsub.s32 1, %v685
    %v687 = vrot.slane %v674, %v686
    %v688 = vadd.f32 %v683, %v687
    %v689 = vmax.f32 %v688, 0.0
    %v690 = vld [vmem:[%s4] sm:$0xff]
    %v691 = vld [vmem:[%s4 + $0x8] sm:$0xff]
    %v692 = vld [vmem:[%s4 + $0x10] sm:$0x1]
    %v693 = vlaneseq
    %v694 = vshrl.u32 %v693, 7
    %v695 = vsub.s32 0, %v694
    %v696 = vrot.slane %v692, %v695
    %v698 = vsel %vm430, %v689, 0
    %700 = vmatprep.subr.mxu0 0.0
    %701 = vmatpush1.msra.mxu0 %v690
    %702 = vmatprep.subr.mxu0 0.0
    %703 = vmatpush1.msra.mxu0 %v691
    %704 = vmatprep.subr.mxu0 0.0
    %705 = vmatpush1.msra.mxu0 0.0
    %706 = vmatprep.subr.mxu0 0.0
    %707 = vmatpush1.msra.mxu0 0.0
    %708 = vmatprep.subr.mxu0 0.0
    %709 = vmatpush1.msra.mxu0 0.0
    %710 = vmatprep.subr.mxu0 0.0
    %711 = vmatpush1.msra.mxu0 0.0
    %712 = vmatprep.subr.mxu0 0.0
    %713 = vmatpush1.msra.mxu0 0.0
    %714 = vmatprep.subr.mxu0 0.0
    %715 = vmatpush1.msra.mxu0 0.0
    %716 = vmatprep.subr.mxu0 0.0
    %717 = vmatpush1.msra.mxu0 0.0
    %718 = vmatprep.subr.mxu0 0.0
    %719 = vmatpush1.msra.mxu0 0.0
    %720 = vmatprep.subr.mxu0 0.0
    %721 = vmatpush1.msra.mxu0 0.0
    %722 = vmatprep.subr.mxu0 0.0
    %723 = vmatpush1.msra.mxu0 0.0
    %724 = vmatprep.subr.mxu0 0.0
    %725 = vmatpush1.msra.mxu0 0.0
    %726 = vmatprep.subr.mxu0 0.0
    %727 = vmatpush1.msra.mxu0 0.0
    %728 = vmatprep.subr.mxu0 0.0
    %729 = vmatpush1.msra.mxu0 0.0
    %730 = vmatprep.subr.mxu0 0.0
    %731 = vmatpush1.msra.mxu0 0.0
    %732 = vmatprep.subr.mxu0 0.0
    %733 = vmatpush1.msra.mxu0 0.0
    %734 = vmatprep.subr.mxu0 0.0
    %735 = vmatpush1.msra.mxu0 0.0
    %736 = vmatprep.subr.mxu0 0.0
    %737 = vmatpush1.msra.mxu0 0.0
    %738 = vmatprep.subr.mxu0 0.0
    %739 = vmatpush1.msra.mxu0 0.0
    %740 = vmatprep.subr.mxu0 0.0
    %741 = vmatpush1.msra.mxu0 0.0
    %742 = vmatprep.subr.mxu0 0.0
    %743 = vmatpush1.msra.mxu0 0.0
    %744 = vmatprep.subr.mxu0 0.0
    %745 = vmatpush1.msra.mxu0 0.0
    %746 = vmatprep.subr.mxu0 0.0
    %747 = vmatpush1.msra.mxu0 0.0
    %748 = vmatprep.subr.mxu0 0.0
    %749 = vmatpush1.msra.mxu0 0.0
    %750 = vmatprep.subr.mxu0 0.0
    %751 = vmatpush1.msra.mxu0 0.0
    %752 = vmatprep.subr.mxu0 0.0
    %753 = vmatpush1.msra.mxu0 0.0
    %754 = vmatprep.subr.mxu0 0.0
    %755 = vmatpush1.msra.mxu0 0.0
    %756 = vmatprep.subr.mxu0 0.0
    %757 = vmatpush1.msra.mxu0 0.0
    %758 = vmatprep.subr.mxu0 0.0
    %759 = vmatpush1.msra.mxu0 0.0
    %760 = vmatprep.subr.mxu0 0.0
    %761 = vmatpush1.msra.mxu0 0.0
    %762 = vmatprep.subr.mxu0 0.0
    %763 = vmatpush1.msra.mxu0 0.0
    %764 = vmatprep.mubr.f32.mxu0 0.0
    %765 = vmatmul.mubr.f32.gmra.mrb[0].mxu0 %v698
    %v766 = vpop.f32.mrb[0].mxu0
    %v767 = vadd.f32 %v696, %v766
    %v768 = vpop.f32.mrb[0].mxu0
    %769 = vdwg.mxu0
    %vm770 = vcmask 39936
    %771 = vst.msk [vmem:[#allocation2] sm:$0xff] %vm770, %v767
    // Predicated region
    $region22: #{tpu_custom_call.1} parent=1 // pred_check
      _
    $region23: #{tpu_custom_call.1} parent=1 // pred_check_branch
      %773 = sbr.rel (0) target = $region25
    $region24: #{tpu_custom_call.1} parent=1 // pred_region
      %s775 = ssub.s32 128, 128
      %776 = vsyncadd [#allocation3], %s775
      %s778 = sshll.u32 [#allocation2], 4
      %s779 = int_to_ptr.vmem [resolvable:$true] %s778
      %781 = dma.vmem_to_hbm [thread:$0]  %s779, 128, %s5, [#allocation3]
    $region25: #{tpu_custom_call.1} parent=1 // pred_fallthru
      _
    // Predicated region
    $region26: #{tpu_custom_call.1} parent=1 // pred_check
      _
    $region27: #{tpu_custom_call.1} parent=1 // pred_check_branch
      %783 = sbr.rel (0) target = $region29
    $region28: #{tpu_custom_call.1} parent=1 // pred_region
      %784 = dma.done [#allocation3], 128
    $region29: #{tpu_custom_call.1} parent=1 // pred_fallthru
      _
    %785 = vsyncpa [#allocation3], 1

</llo_original>
